<compile_context>
chip_gen: v7x
topology: tpu7x:2x2x1
jax: 0.10.0
libtpu: 0.0.40
codegen_flags: <defaults>
</compile_context>

<pallas_src>
import math

import jax
import jax.numpy as jnp
from jax.experimental import pallas as pl
from jax.experimental.pallas import tpu as pltpu


def rotary_embedding(seq_len: int, dim: int, dtype=jnp.float32, max_tile_rows=None):
    """Returns cat((t[:,None]*inv_freq[None,:], same), -1) of shape (seq_len, dim)."""
    assert dim % 2 == 0, "dim must be even"
    assert seq_len > 0

    # Deterministic "parameter", exactly as in the module __init__, laid out in
    # the cat((freqs, freqs), -1) order.
    inv_freq = 1.0 / (10000.0 ** (jnp.arange(0, dim, 2, dtype=jnp.float32) / dim))
    inv_freq_cat = jnp.concatenate([inv_freq, inv_freq])  # (dim,)

    # Generalized lane-dense packing: pack k logical rows per physical row so
    # width = k*dim is a multiple of 128 (unmasked 128-lane stores).  Since
    # 128 = 2^7, k = 128 / gcd(dim, 128) is always a power of two.
    k = math.lcm(dim, 128) // dim
    if k * dim > 16384:  # pathological dims: fall back to unpacked (masked) path
        k = 1
    width = k * dim
    padded_seq = ((seq_len + k - 1) // k) * k
    packed_rows = padded_seq // k

    # Hoisted (1, width) tables:  t*inv = row*(k*inv) + group*inv.
    inv_packed = jnp.tile(inv_freq_cat, (k,))                              # (width,)
    group = (jnp.arange(width, dtype=jnp.int32) // dim).astype(jnp.float32)
    scaled_inv = (float(k) * inv_packed).reshape(1, width)
    lane_off = (group * inv_packed).reshape(1, width)

    # Row tiling: ~4 MiB output tiles, rounded to the sublane pack of `dtype`.
    itemsize = jnp.dtype(dtype).itemsize
    sublane = max(8, 32 // itemsize)  # 8 for f32, 16 for bf16, 32 for int8/fp8
    bytes_per_row = width * itemsize
    rows_cap = max(sublane, ((4 * 1024 * 1024) // max(bytes_per_row, 1)) // sublane * sublane)
    if max_tile_rows is not None:  # test hook to exercise multi-block / ragged paths
        rows_cap = min(rows_cap, max(sublane, (max_tile_rows // sublane) * sublane))
    tile_rows = packed_rows if packed_rows <= rows_cap else rows_cap
    grid = (pl.cdiv(packed_rows, tile_rows),)

    def kernel(scaled_inv_ref, lane_off_ref, out_ref):
        # scaled_inv_ref, lane_off_ref: (1, width) f32, resident across the grid.
        # out_ref: (tile_rows, width) `dtype`.
        i = pl.program_id(0)
        off = (i * tile_rows).astype(jnp.float32)
        # Per-row (1, width) term: grid offset folded into the broadcast add.
        base = off * scaled_inv_ref[...] + lane_off_ref[...]
        row = jax.lax.broadcasted_iota(jnp.int32, (tile_rows, width), 0).astype(jnp.float32)
        out_ref[...] = (row * scaled_inv_ref[...] + base).astype(out_ref.dtype)

    out_packed = pl.pallas_call(
        kernel,
        out_shape=jax.ShapeDtypeStruct((packed_rows, width), dtype),
        grid=grid,
        in_specs=[
            pl.BlockSpec((1, width), lambda i: (0, 0)),
            pl.BlockSpec((1, width), lambda i: (0, 0)),
        ],
        out_specs=pl.BlockSpec((tile_rows, width), lambda i: (i, 0)),
        compiler_params=pltpu.CompilerParams(
            dimension_semantics=("parallel",),
        ),
        cost_estimate=pl.CostEstimate(
            flops=2 * packed_rows * width,
            transcendentals=0,
            bytes_accessed=packed_rows * width * itemsize + 2 * width * 4,
        ),
    )(scaled_inv, lane_off)

    out = out_packed.reshape(padded_seq, dim)
    if padded_seq != seq_len:
        out = out[:seq_len]
    return out


def _reference(seq_len: int, dim: int):
    inv_freq = 1.0 / (10000.0 ** (jnp.arange(0, dim, 2, dtype=jnp.float32) / dim))
    t = jnp.arange(seq_len, dtype=jnp.float32)
    freqs = jnp.einsum("i,j->ij", t, inv_freq)
    return jnp.concatenate([freqs, freqs], axis=-1)


if __name__ == "__main__":
    # No tensor inputs to this module's forward — only (seq_len, device); the
    # inv_freq buffer is deterministic from __init__.  PRNGKey kept for parity
    # with the harness convention (unused).
    _ = jax.random.PRNGKey(0)

    # 1) Small shape on the packed path: dim=32 -> k=4, width=128.
    seq_len, dim = 8, 32
    out = jax.block_until_ready(rotary_embedding(seq_len, dim))
    expected = _reference(seq_len, dim)
    assert out.shape == (seq_len, dim)
    assert out.dtype == jnp.float32
    assert jnp.allclose(out, expected, atol=1e-5, rtol=1e-5)

    # 2) dim not dividing 128 + seq_len needing pad: dim=48 -> k=8, width=384.
    seq_len2, dim2 = 9, 48
    out2 = jax.block_until_ready(rotary_embedding(seq_len2, dim2))
    expected2 = _reference(seq_len2, dim2)
    assert out2.shape == (seq_len2, dim2)
    assert jnp.allclose(out2, expected2, atol=1e-5, rtol=1e-5)

    # 3) Multi-block grid with a ragged last block (packed_rows=10, tile_rows=8).
    seq_len3, dim3 = 40, 32
    out3 = jax.block_until_ready(rotary_embedding(seq_len3, dim3, max_tile_rows=8))
    expected3 = _reference(seq_len3, dim3)
    assert out3.shape == (seq_len3, dim3)
    assert jnp.allclose(out3, expected3, atol=1e-5, rtol=1e-5)

    # 4) bf16 output path (in-kernel cast, halved writeback bytes).
    seq_len4, dim4 = 8, 64
    out4 = jax.block_until_ready(rotary_embedding(seq_len4, dim4, dtype=jnp.bfloat16))
    expected4 = _reference(seq_len4, dim4).astype(jnp.bfloat16)
    assert out4.dtype == jnp.bfloat16
    assert jnp.allclose(out4.astype(jnp.float32), expected4.astype(jnp.float32),
                        atol=1e-2, rtol=1e-2)

    print("KERNEL_OK")
</pallas_src>

<mosaic_0001>
module attributes {stable_mosaic.version = 11 : i64} {
  func.func @kernel(%arg0: i32, %arg1: memref<1x128xf32, #tpu.memory_space<vmem>>, %arg2: memref<1x128xf32, #tpu.memory_space<vmem>>, %arg3: memref<2x128xf32, #tpu.memory_space<vmem>>) attributes {dimension_semantics = [#tpu.dimension_semantics<parallel>], iteration_bounds = array<i64: 1>, scalar_prefetch = 0 : i64, scratch_operands = 0 : i64, tpu.core_type = #tpu.core_type<tc>, window_params = [{pipeline_mode = #tpu.pipeline_mode<synchronous>, transform_indices = @transform_0, window_bounds = array<i64: 1, 128>}, {pipeline_mode = #tpu.pipeline_mode<synchronous>, transform_indices = @transform_1, window_bounds = array<i64: 1, 128>}, {transform_indices = @transform_2, window_bounds = array<i64: 2, 128>}]} {
    %c2_i32 = arith.constant 2 : i32
    %0 = arith.muli %arg0, %c2_i32 : i32
    %1 = arith.sitofp %0 : i32 to f32
    %c0 = arith.constant 0 : index
    %c0_0 = arith.constant 0 : index
    %2 = vector.load %arg1[%c0, %c0_0] : memref<1x128xf32, #tpu.memory_space<vmem>>, vector<1x128xf32>
    %3 = vector.broadcast %1 : f32 to vector<1x128xf32>
    %4 = arith.mulf %3, %2 : vector<1x128xf32>
    %c0_1 = arith.constant 0 : index
    %c0_2 = arith.constant 0 : index
    %5 = vector.load %arg2[%c0_1, %c0_2] : memref<1x128xf32, #tpu.memory_space<vmem>>, vector<1x128xf32>
    %6 = arith.addf %4, %5 : vector<1x128xf32>
    %7 = tpu.iota {dimensions = array<i32: 0>} : vector<2x128xi32>
    %8 = arith.sitofp %7 : vector<2x128xi32> to vector<2x128xf32>
    %c0_3 = arith.constant 0 : index
    %c0_4 = arith.constant 0 : index
    %9 = vector.load %arg1[%c0_3, %c0_4] : memref<1x128xf32, #tpu.memory_space<vmem>>, vector<1x128xf32>
    %10 = vector.broadcast %9 : vector<1x128xf32> to vector<2x128xf32>
    %11 = arith.mulf %8, %10 : vector<2x128xf32>
    %12 = vector.broadcast %6 : vector<1x128xf32> to vector<2x128xf32>
    %13 = arith.addf %11, %12 : vector<2x128xf32>
    %c0_5 = arith.constant 0 : index
    %c0_6 = arith.constant 0 : index
    %14 = vector.load %arg3[%c0_5, %c0_6] : memref<2x128xf32, #tpu.memory_space<vmem>>, vector<2x128xf32>
    tpu.vector_store %arg3[%c0_5, %c0_6], %13 {strides = array<i32>} : memref<2x128xf32, #tpu.memory_space<vmem>>, vector<2x128xf32>,
    return
  }
  func.func @transform_0(%arg0: i32) -> (i32, i32) {
    %c0_i32 = arith.constant 0 : i32
    %c0_i32_0 = arith.constant 0 : i32
    %c0_i32_1 = arith.constant 0 : i32
    return %c0_i32, %c0_i32_0 : i32, i32
  }
  func.func @transform_1(%arg0: i32) -> (i32, i32) {
    %c0_i32 = arith.constant 0 : i32
    %c0_i32_0 = arith.constant 0 : i32
    %c0_i32_1 = arith.constant 0 : i32
    return %c0_i32, %c0_i32_0 : i32, i32
  }
  func.func @transform_2(%arg0: i32) -> (i32, i32) {
    %c0_i32 = arith.constant 0 : i32
    %c0_i32_0 = arith.constant 0 : i32
    return %arg0, %c0_i32 : i32, i32
  }
}

</mosaic_0001>

<llo_original>
// kernel: tpu_custom_call.1
$region0: #{tpu_custom_call.1}
  #allocation0 [shape = 'u32[]', space=smem, size = 0x4, offset = 0x4, fixed_abs, tag = 'smem constant byte address 0x4 - core index']
  #allocation1 [shape = 'u32[144,128]{1,0:T(1,128)}', space=vmem, size = 0x12000, scoped, tag = 'internal scratch']
  %s0 = inlined_call_operand.hbm [shape: f32[1,128], index: 0, kind: input, shape index: {}]
  %s1 = inlined_call_operand.vmem [shape: f32[1,128], index: 1, kind: input, shape index: {}]
  %s2 = inlined_call_operand.hbm [shape: f32[2,128], index: 2, kind: output, shape index: {}]
  %s3 = sld [smem:[#allocation0]]
  $region22: #{tpu_custom_call.1} parent=0
    _
  %s5 = ssub.s32 1, %s3
  %s6 = scalar_select 0, %s5, %s3
  $region1: #{tpu_custom_call.1} parent=0
    #allocation2 [shape = 'u8[512]{0}', space=vmem, size = 0x400, scoped, tag = 'input window, operand 0, single buffered']
    #allocation3 [shape = 's32[1]{0}', space=sflag, size = 0x4, scoped, tag = 'scoped memory for tpu_custom_call.1']
    #allocation4 [shape = 's32[1]{0}', space=sflag, size = 0x4, scoped, tag = 'scoped memory for tpu_custom_call.1']
    #allocation5 [shape = 'u8[1024]{0}', space=vmem, size = 0x400, scoped, tag = 'output window, operand 0, single buffered']
    %7 = vsyncpa [#allocation3], 0
    %8 = vsyncpa [#allocation4], 0
    // Predicated region
    $region2: #{tpu_custom_call.1} parent=1 // pred_check
      _
    $region3: #{tpu_custom_call.1} parent=1 // pred_check_branch
      %10 = sbr.rel (0) target = $region5
    $region4: #{tpu_custom_call.1} parent=1 // pred_region
      %s12 = ssub.s32 16, 16
      %13 = vsyncadd [#allocation3], %s12
      %s15 = sshll.u32 [#allocation2], 4
      %s16 = int_to_ptr.vmem [resolvable:$true] %s15
      %18 = dma.hbm_to_vmem [thread:$0]  %s0, 16, %s16, [#allocation3]
    $region5: #{tpu_custom_call.1} parent=1 // pred_fallthru
      _
    // Predicated region
    $region6: #{tpu_custom_call.1} parent=1 // pred_check
      _
    $region7: #{tpu_custom_call.1} parent=1 // pred_check_branch
      %20 = sbr.rel (0) target = $region9
    $region8: #{tpu_custom_call.1} parent=1 // pred_region
      _
    $region9: #{tpu_custom_call.1} parent=1 // pred_fallthru
      _
    // Predicated region
    $region10: #{tpu_custom_call.1} parent=1 // pred_check
      _
    $region11: #{tpu_custom_call.1} parent=1 // pred_check_branch
      %22 = sbr.rel (0) target = $region13
    $region12: #{tpu_custom_call.1} parent=1 // pred_region
      %23 = dma.done [#allocation3], 16
    $region13: #{tpu_custom_call.1} parent=1 // pred_fallthru
      _
    %s24 = smul.u32 0, 2
    %s25 = scvt.s32.f32 %s24
    %v26 = vld [vmem:[#allocation2] sm:$0x1]
    %v27 = vstv %s25
    %v28 = vmul.f32 %v27, %v26
    %v29 = vld [vmem:[%s1] sm:$0x1]
    %v30 = vadd.f32 %v28, %v29
    %v31 = vlaneseq
    %v32 = vshrl.u32 %v31, 7
    %v33 = vcvt.s32.f32 %v32
    %v35 = vlaneseq
    %v36 = vshrl.u32 %v35, 7
    %v37 = vsub.s32 0, %v36
    %v38 = vrot.slane %v26, %v37
    %v40 = vmul.f32 %v33, %v38
    %v42 = vlaneseq
    %v43 = vshrl.u32 %v42, 7
    %v44 = vsub.s32 0, %v43
    %v45 = vrot.slane %v30, %v44
    %v47 = vadd.f32 %v40, %v45
    %48 = vst [vmem:[#allocation5] sm:$0x3] %v47
    // Predicated region
    $region14: #{tpu_custom_call.1} parent=1 // pred_check
      _
    $region15: #{tpu_custom_call.1} parent=1 // pred_check_branch
      %50 = sbr.rel (0) target = $region17
    $region16: #{tpu_custom_call.1} parent=1 // pred_region
      %s52 = ssub.s32 32, 32
      %53 = vsyncadd [#allocation4], %s52
      %s55 = sshll.u32 [#allocation5], 4
      %s56 = int_to_ptr.vmem [resolvable:$true] %s55
      %58 = dma.vmem_to_hbm [thread:$0]  %s56, 32, %s2, [#allocation4]
    $region17: #{tpu_custom_call.1} parent=1 // pred_fallthru
      _
    // Predicated region
    $region18: #{tpu_custom_call.1} parent=1 // pred_check
      _
    $region19: #{tpu_custom_call.1} parent=1 // pred_check_branch
      %60 = sbr.rel (0) target = $region21
    $region20: #{tpu_custom_call.1} parent=1 // pred_region
      %61 = dma.done [#allocation4], 32
    $region21: #{tpu_custom_call.1} parent=1 // pred_fallthru
      _
    %62 = vsyncpa [#allocation3], 1
    %63 = vsyncpa [#allocation4], 1

</llo_original>
